<compile_context>
chip_gen: v7x
topology: tpu7x:2x2x1
jax: 0.10.0
libtpu: 0.0.40
codegen_flags: <defaults>
</compile_context>

<pallas_src>
import functools

import jax
import jax.numpy as jnp
from jax.experimental import pallas as pl
from jax.experimental.pallas import tpu as pltpu


# ----------------------------- Pallas kernel --------------------------------
def _coupling_kernel(types_ref, coords_ref, ls_tab_ref, sh_tab_ref, out_ref,
                     *, reverse: bool, num_types: int):
    """Lane-dense elementwise coupling transform.

    types_ref  : (1, R) int32   atom-type id per row
    coords_ref : (3, R) f32     coordinates (rows on the lane axis)
    ls_tab_ref : (3, T) f32     per-type log(scale) table (already tanh'ed)
    sh_tab_ref : (3, T) f32     per-type shift table
    out_ref    : (3, R) f32     transformed coordinates
    """
    types = types_ref[...]                         # (1, R) int32
    x = coords_ref[...]                            # (3, R) f32

    # Per-row table lookup as an unrolled select-sum over the (tiny) type set.
    log_scale = jnp.zeros_like(x)                  # (3, R)
    shift = jnp.zeros_like(x)                      # (3, R)
    for t in range(num_types):                     # unrolled at trace time
        sel = (types == t).astype(jnp.float32)                       # (1, R)
        log_scale = log_scale + ls_tab_ref[:, t:t + 1] * sel         # (3,1)*(1,R)
        shift = shift + sh_tab_ref[:, t:t + 1] * sel

    if reverse:
        out_ref[...] = (x - shift) * jnp.exp(-log_scale)
    else:
        out_ref[...] = x * jnp.exp(log_scale) + shift


# ------------------------------ Wrapper --------------------------------------
def pt_nvp_coupling(coordinates, atom_types, masked_elements, params,
                    source_temp, target_temp, log_det=None, reverse=False,
                    adj_list=None, edge_batch_idx=None, row_block=4096):
    """PTNVPCouplingLayer.forward (position-only Real NVP coupling)."""
    # TODO(synk): adj_list / edge_batch_idx graph message passing (edge scatter)
    # is not used by this synthetic coordinate-invariant conditioner.
    B, N, _ = coordinates.shape
    T, E = params["emb_table"].shape
    rows = B * N

    # --- coordinate-invariant conditioner, evaluated once per atom TYPE ------
    # Fold the scalar temperatures into the first-layer bias (no [B,N,2] bcast).
    w1 = params["w1"]                                          # [E+2, H]
    b1_eff = (params["b1"]
              + (0.01 * source_temp) * w1[E:E + 1]
              + (0.01 * target_temp) * w1[E + 1:E + 2])        # [1, H]
    h_tab = jax.nn.relu(params["emb_table"] @ w1[:E] + b1_eff)         # [T, H]
    log_scale_tab = jnp.tanh(h_tab @ params["w2s"] + params["b2s"])    # [T, 3] == log(scale)
    shift_tab = h_tab @ params["w2t"] + params["b2t"]                  # [T, 3]

    # --- lane-dense layout: rows on the last (lane) axis ----------------------
    coords_t = coordinates.astype(jnp.float32).reshape(rows, 3).T       # (3, rows)
    types_t = atom_types.reshape(1, rows).astype(jnp.int32)             # (1, rows)
    ls_tab_t = log_scale_tab.T.astype(jnp.float32)                      # (3, T)
    sh_tab_t = shift_tab.T.astype(jnp.float32)                          # (3, T)

    # Large blocks; single block when everything fits.  No padded HBM copies —
    # Pallas handles the ragged last block (OOB output lanes are dropped).
    if rows <= row_block:
        row_block = rows                        # block == full array dims
    else:
        row_block = max((row_block // 128) * 128, 128)
    grid = pl.cdiv(rows, row_block)

    kernel = functools.partial(_coupling_kernel, reverse=bool(reverse),
                               num_types=int(T))

    cost = pl.CostEstimate(
        flops=rows * (12 * T + 9),
        transcendentals=rows * 3,
        bytes_accessed=rows * (4 + 12 + 12) + 2 * T * 3 * 4,
    )

    y_t = pl.pallas_call(
        kernel,
        out_shape=jax.ShapeDtypeStruct((3, rows), jnp.float32),
        grid_spec=pltpu.PrefetchScalarGridSpec(
            num_scalar_prefetch=0,
            grid=(grid,),
            in_specs=[
                pl.BlockSpec((1, row_block), lambda r: (0, r)),   # atom types
                pl.BlockSpec((3, row_block), lambda r: (0, r)),   # coordinates
                pl.BlockSpec((3, T), lambda r: (0, 0)),           # log-scale table
                pl.BlockSpec((3, T), lambda r: (0, 0)),           # shift table
            ],
            out_specs=pl.BlockSpec((3, row_block), lambda r: (0, r)),
        ),
        compiler_params=pltpu.CompilerParams(
            dimension_semantics=("parallel",)),
        cost_estimate=cost,
    )(types_t, coords_t, ls_tab_t, sh_tab_t)

    y = y_t.T.reshape(B, N, 3)

    # Per-molecule log-det from the per-type table + padding mask (tiny [B, N]
    # reduction; the conditioner is coordinate-invariant so no per-row kernel
    # output is needed).
    per_type_ld = jnp.sum(log_scale_tab, axis=-1)                        # [T]
    notmask = (~masked_elements).astype(jnp.float32)                     # [B, N]
    layer_log_det = jnp.sum(per_type_ld[atom_types] * notmask, axis=1)   # [B]
    if reverse:
        layer_log_det = -layer_log_det

    log_det = layer_log_det if log_det is None else log_det + layer_log_det
    return y, log_det


# --------------------------- pure-JAX reference -------------------------------
def _reference(coordinates, atom_types, masked_elements, params,
               source_temp, target_temp, log_det=None, reverse=False):
    B, N, _ = coordinates.shape
    emb = params["emb_table"][atom_types]
    temps = jnp.broadcast_to(
        jnp.array([source_temp, target_temp], jnp.float32) * 0.01, (B, N, 2))
    feat = jnp.concatenate([emb, temps], axis=-1)
    h = jax.nn.relu(feat @ params["w1"] + params["b1"])
    scale = jnp.exp(jnp.tanh(h @ params["w2s"] + params["b2s"]))
    shift = h @ params["w2t"] + params["b2t"]
    if reverse:
        y = (coordinates - shift) / scale
    else:
        y = coordinates * scale + shift
    log_scales = jnp.log(scale) * (~masked_elements)[:, :, None]
    ld = jnp.sum(log_scales, axis=(-1, -2))
    if reverse:
        ld = -ld
    return y, (log_det + ld) if log_det is not None else ld


# ------------------------------- main -----------------------------------------
if __name__ == "__main__":
    B, N = 2, 16                 # batch of 2 molecules, 16 atoms (with padding)
    NUM_ATOM_TYPES, EMB, HID = 5, 8, 32

    key = jax.random.PRNGKey(0)
    ks = jax.random.split(key, 8)

    params = {
        "emb_table": 0.1 * jax.random.normal(ks[0], (NUM_ATOM_TYPES, EMB), jnp.float32),
        "w1":  0.2 * jax.random.normal(ks[1], (EMB + 2, HID), jnp.float32),
        "b1":  0.05 * jax.random.normal(ks[7], (1, HID), jnp.float32),
        "w2s": 0.1 * jax.random.normal(ks[2], (HID, 3), jnp.float32),
        "b2s": jnp.zeros((1, 3), jnp.float32),
        "w2t": 0.1 * jax.random.normal(ks[3], (HID, 3), jnp.float32),
        "b2t": jnp.zeros((1, 3), jnp.float32),
    }

    coordinates = jax.random.normal(ks[4], (B, N, 3), jnp.float32)
    atom_types = jax.random.randint(ks[5], (B, N), 0, NUM_ATOM_TYPES)
    # last 3 atoms of each molecule are padding
    masked_elements = jnp.broadcast_to(jnp.arange(N)[None, :] >= (N - 3), (B, N))
    log_det_in = jax.random.normal(ks[6], (B,), jnp.float32)

    src_T, tgt_T = 300.0, 600.0

    # forward direction
    y, ld = pt_nvp_coupling(coordinates, atom_types, masked_elements, params,
                            src_T, tgt_T, log_det=log_det_in, reverse=False)
    jax.block_until_ready((y, ld))
    y_ref, ld_ref = _reference(coordinates, atom_types, masked_elements, params,
                               src_T, tgt_T, log_det=log_det_in, reverse=False)

    # reverse direction
    x_back, ld_back = pt_nvp_coupling(y, atom_types, masked_elements, params,
                                      src_T, tgt_T, log_det=None, reverse=True)
    jax.block_until_ready((x_back, ld_back))
    x_ref, ldb_ref = _reference(y, atom_types, masked_elements, params,
                                src_T, tgt_T, log_det=None, reverse=True)

    assert jnp.allclose(y, y_ref, atol=1e-5, rtol=1e-5)
    assert jnp.allclose(ld, ld_ref, atol=1e-5, rtol=1e-5)
    assert jnp.allclose(x_back, x_ref, atol=1e-5, rtol=1e-5)
    assert jnp.allclose(ld_back, ldb_ref, atol=1e-5, rtol=1e-5)
    # True round trip (the conditioner is coordinate-invariant, so the coupling
    # is a genuine bijection).
    assert jnp.allclose(x_back, coordinates, atol=1e-4, rtol=1e-4)

    print("KERNEL_OK")
</pallas_src>

<mosaic_0001>
module attributes {stable_mosaic.version = 11 : i64} {
  func.func @_coupling_kernel(%arg0: i32, %arg1: memref<1x32xi32, #tpu.memory_space<vmem>>, %arg2: memref<3x32xf32, #tpu.memory_space<vmem>>, %arg3: memref<3x5xf32, #tpu.memory_space<vmem>>, %arg4: memref<3x5xf32, #tpu.memory_space<vmem>>, %arg5: memref<3x32xf32, #tpu.memory_space<vmem>>) attributes {dimension_semantics = [#tpu.dimension_semantics<parallel>], iteration_bounds = array<i64: 1>, scalar_prefetch = 0 : i64, scratch_operands = 0 : i64, tpu.core_type = #tpu.core_type<tc>, window_params = [{transform_indices = @transform_0, window_bounds = array<i64: 1, 32>}, {transform_indices = @transform_1, window_bounds = array<i64: 3, 32>}, {pipeline_mode = #tpu.pipeline_mode<synchronous>, transform_indices = @transform_2, window_bounds = array<i64: 3, 5>}, {pipeline_mode = #tpu.pipeline_mode<synchronous>, transform_indices = @transform_3, window_bounds = array<i64: 3, 5>}, {transform_indices = @transform_4, window_bounds = array<i64: 3, 32>}]} {
    %c0 = arith.constant 0 : index
    %c0_0 = arith.constant 0 : index
    %0 = vector.load %arg1[%c0, %c0_0] : memref<1x32xi32, #tpu.memory_space<vmem>>, vector<1x32xi32>
    %c0_1 = arith.constant 0 : index
    %c0_2 = arith.constant 0 : index
    %1 = vector.load %arg2[%c0_1, %c0_2] : memref<3x32xf32, #tpu.memory_space<vmem>>, vector<3x32xf32>
    %cst = arith.constant 0.000000e+00 : f32
    %2 = vector.broadcast %cst : f32 to vector<3x32xf32>
    %cst_3 = arith.constant 0.000000e+00 : f32
    %3 = vector.broadcast %cst_3 : f32 to vector<3x32xf32>
    %c0_i32 = arith.constant 0 : i32
    %4 = vector.broadcast %c0_i32 : i32 to vector<1x32xi32>
    %5 = arith.cmpi eq, %0, %4 : vector<1x32xi32>
    %6 = arith.extui %5 : vector<1x32xi1> to vector<1x32xi32>
    %7 = arith.sitofp %6 : vector<1x32xi32> to vector<1x32xf32>
    %c0_4 = arith.constant 0 : index
    %c0_5 = arith.constant 0 : index
    %8 = vector.load %arg3[%c0_4, %c0_5] : memref<3x5xf32, #tpu.memory_space<vmem>>, vector<3x1xf32>
    %9 = vector.broadcast %8 : vector<3x1xf32> to vector<3x32xf32>
    %10 = vector.broadcast %7 : vector<1x32xf32> to vector<3x32xf32>
    %11 = arith.mulf %9, %10 : vector<3x32xf32>
    %12 = arith.addf %2, %11 : vector<3x32xf32>
    %c0_6 = arith.constant 0 : index
    %c0_7 = arith.constant 0 : index
    %13 = vector.load %arg4[%c0_6, %c0_7] : memref<3x5xf32, #tpu.memory_space<vmem>>, vector<3x1xf32>
    %14 = vector.broadcast %13 : vector<3x1xf32> to vector<3x32xf32>
    %15 = vector.broadcast %7 : vector<1x32xf32> to vector<3x32xf32>
    %16 = arith.mulf %14, %15 : vector<3x32xf32>
    %17 = arith.addf %3, %16 : vector<3x32xf32>
    %c1_i32 = arith.constant 1 : i32
    %18 = vector.broadcast %c1_i32 : i32 to vector<1x32xi32>
    %19 = arith.cmpi eq, %0, %18 : vector<1x32xi32>
    %20 = arith.extui %19 : vector<1x32xi1> to vector<1x32xi32>
    %21 = arith.sitofp %20 : vector<1x32xi32> to vector<1x32xf32>
    %c0_8 = arith.constant 0 : index
    %c1 = arith.constant 1 : index
    %22 = vector.load %arg3[%c0_8, %c1] : memref<3x5xf32, #tpu.memory_space<vmem>>, vector<3x1xf32>
    %23 = vector.broadcast %22 : vector<3x1xf32> to vector<3x32xf32>
    %24 = vector.broadcast %21 : vector<1x32xf32> to vector<3x32xf32>
    %25 = arith.mulf %23, %24 : vector<3x32xf32>
    %26 = arith.addf %12, %25 : vector<3x32xf32>
    %c0_9 = arith.constant 0 : index
    %c1_10 = arith.constant 1 : index
    %27 = vector.load %arg4[%c0_9, %c1_10] : memref<3x5xf32, #tpu.memory_space<vmem>>, vector<3x1xf32>
    %28 = vector.broadcast %27 : vector<3x1xf32> to vector<3x32xf32>
    %29 = vector.broadcast %21 : vector<1x32xf32> to vector<3x32xf32>
    %30 = arith.mulf %28, %29 : vector<3x32xf32>
    %31 = arith.addf %17, %30 : vector<3x32xf32>
    %c2_i32 = arith.constant 2 : i32
    %32 = vector.broadcast %c2_i32 : i32 to vector<1x32xi32>
    %33 = arith.cmpi eq, %0, %32 : vector<1x32xi32>
    %34 = arith.extui %33 : vector<1x32xi1> to vector<1x32xi32>
    %35 = arith.sitofp %34 : vector<1x32xi32> to vector<1x32xf32>
    %c0_11 = arith.constant 0 : index
    %c2 = arith.constant 2 : index
    %36 = vector.load %arg3[%c0_11, %c2] : memref<3x5xf32, #tpu.memory_space<vmem>>, vector<3x1xf32>
    %37 = vector.broadcast %36 : vector<3x1xf32> to vector<3x32xf32>
    %38 = vector.broadcast %35 : vector<1x32xf32> to vector<3x32xf32>
    %39 = arith.mulf %37, %38 : vector<3x32xf32>
    %40 = arith.addf %26, %39 : vector<3x32xf32>
    %c0_12 = arith.constant 0 : index
    %c2_13 = arith.constant 2 : index
    %41 = vector.load %arg4[%c0_12, %c2_13] : memref<3x5xf32, #tpu.memory_space<vmem>>, vector<3x1xf32>
    %42 = vector.broadcast %41 : vector<3x1xf32> to vector<3x32xf32>
    %43 = vector.broadcast %35 : vector<1x32xf32> to vector<3x32xf32>
    %44 = arith.mulf %42, %43 : vector<3x32xf32>
    %45 = arith.addf %31, %44 : vector<3x32xf32>
    %c3_i32 = arith.constant 3 : i32
    %46 = vector.broadcast %c3_i32 : i32 to vector<1x32xi32>
    %47 = arith.cmpi eq, %0, %46 : vector<1x32xi32>
    %48 = arith.extui %47 : vector<1x32xi1> to vector<1x32xi32>
    %49 = arith.sitofp %48 : vector<1x32xi32> to vector<1x32xf32>
    %c0_14 = arith.constant 0 : index
    %c3 = arith.constant 3 : index
    %50 = vector.load %arg3[%c0_14, %c3] : memref<3x5xf32, #tpu.memory_space<vmem>>, vector<3x1xf32>
    %51 = vector.broadcast %50 : vector<3x1xf32> to vector<3x32xf32>
    %52 = vector.broadcast %49 : vector<1x32xf32> to vector<3x32xf32>
    %53 = arith.mulf %51, %52 : vector<3x32xf32>
    %54 = arith.addf %40, %53 : vector<3x32xf32>
    %c0_15 = arith.constant 0 : index
    %c3_16 = arith.constant 3 : index
    %55 = vector.load %arg4[%c0_15, %c3_16] : memref<3x5xf32, #tpu.memory_space<vmem>>, vector<3x1xf32>
    %56 = vector.broadcast %55 : vector<3x1xf32> to vector<3x32xf32>
    %57 = vector.broadcast %49 : vector<1x32xf32> to vector<3x32xf32>
    %58 = arith.mulf %56, %57 : vector<3x32xf32>
    %59 = arith.addf %45, %58 : vector<3x32xf32>
    %c4_i32 = arith.constant 4 : i32
    %60 = vector.broadcast %c4_i32 : i32 to vector<1x32xi32>
    %61 = arith.cmpi eq, %0, %60 : vector<1x32xi32>
    %62 = arith.extui %61 : vector<1x32xi1> to vector<1x32xi32>
    %63 = arith.sitofp %62 : vector<1x32xi32> to vector<1x32xf32>
    %c0_17 = arith.constant 0 : index
    %c4 = arith.constant 4 : index
    %64 = vector.load %arg3[%c0_17, %c4] : memref<3x5xf32, #tpu.memory_space<vmem>>, vector<3x1xf32>
    %65 = vector.broadcast %64 : vector<3x1xf32> to vector<3x32xf32>
    %66 = vector.broadcast %63 : vector<1x32xf32> to vector<3x32xf32>
    %67 = arith.mulf %65, %66 : vector<3x32xf32>
    %68 = arith.addf %54, %67 : vector<3x32xf32>
    %c0_18 = arith.constant 0 : index
    %c4_19 = arith.constant 4 : index
    %69 = vector.load %arg4[%c0_18, %c4_19] : memref<3x5xf32, #tpu.memory_space<vmem>>, vector<3x1xf32>
    %70 = vector.broadcast %69 : vector<3x1xf32> to vector<3x32xf32>
    %71 = vector.broadcast %63 : vector<1x32xf32> to vector<3x32xf32>
    %72 = arith.mulf %70, %71 : vector<3x32xf32>
    %73 = arith.addf %59, %72 : vector<3x32xf32>
    %74 = math.exp %68 : vector<3x32xf32>
    %75 = arith.mulf %1, %74 : vector<3x32xf32>
    %76 = arith.addf %75, %73 : vector<3x32xf32>
    %c0_20 = arith.constant 0 : index
    %c0_21 = arith.constant 0 : index
    %77 = vector.load %arg5[%c0_20, %c0_21] : memref<3x32xf32, #tpu.memory_space<vmem>>, vector<3x32xf32>
    tpu.vector_store %arg5[%c0_20, %c0_21], %76 {strides = array<i32>} : memref<3x32xf32, #tpu.memory_space<vmem>>, vector<3x32xf32>,
    return
  }
  func.func @transform_0(%arg0: i32) -> (i32, i32) {
    %c0_i32 = arith.constant 0 : i32
    %c0_i32_0 = arith.constant 0 : i32
    return %c0_i32, %arg0 : i32, i32
  }
  func.func @transform_1(%arg0: i32) -> (i32, i32) {
    %c0_i32 = arith.constant 0 : i32
    %c0_i32_0 = arith.constant 0 : i32
    return %c0_i32, %arg0 : i32, i32
  }
  func.func @transform_2(%arg0: i32) -> (i32, i32) {
    %c0_i32 = arith.constant 0 : i32
    %c0_i32_0 = arith.constant 0 : i32
    %c0_i32_1 = arith.constant 0 : i32
    return %c0_i32, %c0_i32_0 : i32, i32
  }
  func.func @transform_3(%arg0: i32) -> (i32, i32) {
    %c0_i32 = arith.constant 0 : i32
    %c0_i32_0 = arith.constant 0 : i32
    %c0_i32_1 = arith.constant 0 : i32
    return %c0_i32, %c0_i32_0 : i32, i32
  }
  func.func @transform_4(%arg0: i32) -> (i32, i32) {
    %c0_i32 = arith.constant 0 : i32
    %c0_i32_0 = arith.constant 0 : i32
    return %c0_i32, %arg0 : i32, i32
  }
}

</mosaic_0001>

<llo_original>
// kernel: tpu_custom_call.1
$region0: #{tpu_custom_call.1}
  #allocation0 [shape = 'u32[]', space=smem, size = 0x4, offset = 0x4, fixed_abs, tag = 'smem constant byte address 0x4 - core index']
  #allocation1 [shape = 'u32[144,128]{1,0:T(1,128)}', space=vmem, size = 0x12000, scoped, tag = 'internal scratch']
  %s0 = inlined_call_operand.hbm [shape: s32[1,32], index: 0, kind: input, shape index: {}]
  %s1 = inlined_call_operand.hbm [shape: f32[3,32], index: 1, kind: input, shape index: {}]
  %s2 = inlined_call_operand.vmem [shape: f32[3,5], index: 2, kind: input, shape index: {}]
  %s3 = inlined_call_operand.vmem [shape: f32[3,5], index: 3, kind: input, shape index: {}]
  %s4 = inlined_call_operand.hbm [shape: f32[3,32], index: 4, kind: output, shape index: {}]
  %s5 = sld [smem:[#allocation0]]
  $region34: #{tpu_custom_call.1} parent=0
    _
  %s7 = ssub.s32 1, %s5
  %s8 = scalar_select 0, %s7, %s5
  $region1: #{tpu_custom_call.1} parent=0
    #allocation2 [shape = 'u8[512]{0}', space=vmem, size = 0x400, scoped, tag = 'input window, operand 0, single buffered']
    #allocation3 [shape = 's32[1]{0}', space=sflag, size = 0x4, scoped, tag = 'scoped memory for tpu_custom_call.1']
    #allocation4 [shape = 's32[1]{0}', space=sflag, size = 0x4, scoped, tag = 'scoped memory for tpu_custom_call.1']
    #allocation5 [shape = 'u8[2048]{0}', space=vmem, size = 0x800, scoped, tag = 'input window, operand 1, single buffered']
    #allocation6 [shape = 's32[1]{0}', space=sflag, size = 0x4, scoped, tag = 'scoped memory for tpu_custom_call.1']
    #allocation7 [shape = 'u8[2048]{0}', space=vmem, size = 0x800, scoped, tag = 'output window, operand 0, single buffered']
    %9 = vsyncpa [#allocation3], 0
    %10 = vsyncpa [#allocation6], 0
    %11 = vsyncpa [#allocation4], 0
    // Predicated region
    $region2: #{tpu_custom_call.1} parent=1 // pred_check
      _
    $region3: #{tpu_custom_call.1} parent=1 // pred_check_branch
      %13 = sbr.rel (0) target = $region5
    $region4: #{tpu_custom_call.1} parent=1 // pred_region
      %s15 = ssub.s32 16, 16
      %16 = vsyncadd [#allocation3], %s15
      %s18 = sshll.u32 [#allocation2], 4
      %s19 = int_to_ptr.vmem [resolvable:$true] %s18
      %21 = dma.hbm_to_vmem [thread:$0]  %s0, 16, %s19, [#allocation3]
    $region5: #{tpu_custom_call.1} parent=1 // pred_fallthru
      _
    // Predicated region
    $region6: #{tpu_custom_call.1} parent=1 // pred_check
      _
    $region7: #{tpu_custom_call.1} parent=1 // pred_check_branch
      %23 = sbr.rel (0) target = $region9
    $region8: #{tpu_custom_call.1} parent=1 // pred_region
      %s25 = ssub.s32 64, 64
      %26 = vsyncadd [#allocation6], %s25
      %s28 = sshll.u32 [#allocation5], 4
      %s29 = int_to_ptr.vmem [resolvable:$true] %s28
      %31 = dma.hbm_to_vmem [thread:$0]  %s1, 64, %s29, [#allocation6]
    $region9: #{tpu_custom_call.1} parent=1 // pred_fallthru
      _
    // Predicated region
    $region10: #{tpu_custom_call.1} parent=1 // pred_check
      _
    $region11: #{tpu_custom_call.1} parent=1 // pred_check_branch
      %33 = sbr.rel (0) target = $region13
    $region12: #{tpu_custom_call.1} parent=1 // pred_region
      _
    $region13: #{tpu_custom_call.1} parent=1 // pred_fallthru
      _
    // Predicated region
    $region14: #{tpu_custom_call.1} parent=1 // pred_check
      _
    $region15: #{tpu_custom_call.1} parent=1 // pred_check_branch
      %35 = sbr.rel (0) target = $region17
    $region16: #{tpu_custom_call.1} parent=1 // pred_region
      _
    $region17: #{tpu_custom_call.1} parent=1 // pred_fallthru
      _
    // Predicated region
    $region18: #{tpu_custom_call.1} parent=1 // pred_check
      _
    $region19: #{tpu_custom_call.1} parent=1 // pred_check_branch
      %37 = sbr.rel (0) target = $region21
    $region20: #{tpu_custom_call.1} parent=1 // pred_region
      %38 = dma.done [#allocation3], 16
    $region21: #{tpu_custom_call.1} parent=1 // pred_fallthru
      _
    // Predicated region
    $region22: #{tpu_custom_call.1} parent=1 // pred_check
      _
    $region23: #{tpu_custom_call.1} parent=1 // pred_check_branch
      %40 = sbr.rel (0) target = $region25
    $region24: #{tpu_custom_call.1} parent=1 // pred_region
      %41 = dma.done [#allocation6], 64
    $region25: #{tpu_custom_call.1} parent=1 // pred_fallthru
      _
    %v42 = vld [vmem:[#allocation2] sm:$0x1]
    %v43 = vld [vmem:[#allocation5] sm:$0x7]
    %vm44 = vcmp.eq.s32.totalorder %v42, 0
    %v45 = vsel %vm44, 1, 0
    %v46 = vcvt.s32.f32 %v45
    %v47 = vld [vmem:[%s2] sm:$0x7]
    %49 = vset.pattern.permute.xlu0 0
    %50 = vperm.xlu0 %49, %v47
    %v51 = vpop.permute.xlu0 %50
    %v54 = vlaneseq
    %v55 = vshrl.u32 %v54, 7
    %v56 = vsub.s32 0, %v55
    %v57 = vrot.slane %v46, %v56
    %v59 = vmul.f32 %v51, %v57
    %v60 = vadd.f32 %v59, 0.0
    %v61 = vld [vmem:[%s3] sm:$0x7]
    %63 = vset.pattern.permute.xlu0 0
    %64 = vperm.xlu0 %63, %v61
    %v65 = vpop.permute.xlu0 %64
    %v67 = vmul.f32 %v65, %v57
    %v68 = vadd.f32 %v67, 0.0
    %vm69 = vcmp.eq.s32.totalorder %v42, 1
    %v70 = vsel %vm69, 1, 0
    %v71 = vcvt.s32.f32 %v70
    %72 = vset.pattern.permute.xlu0 1
    %73 = vperm.xlu0 %72, %v47
    %v74 = vpop.permute.xlu0 %73
    %v77 = vlaneseq
    %v78 = vshrl.u32 %v77, 7
    %v79 = vsub.s32 0, %v78
    %v80 = vrot.slane %v71, %v79
    %v82 = vmul.f32 %v74, %v80
    %v83 = vadd.f32 %v60, %v82
    %84 = vset.pattern.permute.xlu0 1
    %85 = vperm.xlu0 %84, %v61
    %v86 = vpop.permute.xlu0 %85
    %v88 = vmul.f32 %v86, %v80
    %v89 = vadd.f32 %v68, %v88
    %vm90 = vcmp.eq.s32.totalorder %v42, 2
    %v91 = vsel %vm90, 1, 0
    %v92 = vcvt.s32.f32 %v91
    %93 = vset.pattern.permute.xlu0 2
    %94 = vperm.xlu0 %93, %v47
    %v95 = vpop.permute.xlu0 %94
    %v98 = vlaneseq
    %v99 = vshrl.u32 %v98, 7
    %v100 = vsub.s32 0, %v99
    %v101 = vrot.slane %v92, %v100
    %v103 = vmul.f32 %v95, %v101
    %v104 = vadd.f32 %v83, %v103
    %105 = vset.pattern.permute.xlu0 2
    %106 = vperm.xlu0 %105, %v61
    %v107 = vpop.permute.xlu0 %106
    %v109 = vmul.f32 %v107, %v101
    %v110 = vadd.f32 %v89, %v109
    %vm111 = vcmp.eq.s32.totalorder %v42, 3
    %v112 = vsel %vm111, 1, 0
    %v113 = vcvt.s32.f32 %v112
    %114 = vset.pattern.permute.xlu0 3
    %115 = vperm.xlu0 %114, %v47
    %v116 = vpop.permute.xlu0 %115
    %v119 = vlaneseq
    %v120 = vshrl.u32 %v119, 7
    %v121 = vsub.s32 0, %v120
    %v122 = vrot.slane %v113, %v121
    %v124 = vmul.f32 %v116, %v122
    %v125 = vadd.f32 %v104, %v124
    %126 = vset.pattern.permute.xlu0 3
    %127 = vperm.xlu0 %126, %v61
    %v128 = vpop.permute.xlu0 %127
    %v130 = vmul.f32 %v128, %v122
    %v131 = vadd.f32 %v110, %v130
    %vm132 = vcmp.eq.s32.totalorder %v42, 4
    %v133 = vsel %vm132, 1, 0
    %v134 = vcvt.s32.f32 %v133
    %135 = vset.pattern.permute.xlu0 4
    %136 = vperm.xlu0 %135, %v47
    %v137 = vpop.permute.xlu0 %136
    %v140 = vlaneseq
    %v141 = vshrl.u32 %v140, 7
    %v142 = vsub.s32 0, %v141
    %v143 = vrot.slane %v134, %v142
    %v145 = vmul.f32 %v137, %v143
    %v146 = vadd.f32 %v125, %v145
    %147 = vset.pattern.permute.xlu0 4
    %148 = vperm.xlu0 %147, %v61
    %v149 = vpop.permute.xlu0 %148
    %v151 = vmul.f32 %v149, %v143
    %v152 = vadd.f32 %v131, %v151
    %v153 = vmul.f32 %v146, 1.442695
    %v154 = vpow.pop %v153
    %v155 = vmul.f32 %v43, %v154
    %v156 = vadd.f32 %v155, %v152
    %vm157 = vcmask 256000
    %158 = vst.msk [vmem:[#allocation7] sm:$0x7] %vm157, %v156
    // Predicated region
    $region26: #{tpu_custom_call.1} parent=1 // pred_check
      _
    $region27: #{tpu_custom_call.1} parent=1 // pred_check_branch
      %160 = sbr.rel (0) target = $region29
    $region28: #{tpu_custom_call.1} parent=1 // pred_region
      %s162 = ssub.s32 64, 64
      %163 = vsyncadd [#allocation4], %s162
      %s165 = sshll.u32 [#allocation7], 4
      %s166 = int_to_ptr.vmem [resolvable:$true] %s165
      %168 = dma.vmem_to_hbm [thread:$0]  %s166, 64, %s4, [#allocation4]
    $region29: #{tpu_custom_call.1} parent=1 // pred_fallthru
      _
    // Predicated region
    $region30: #{tpu_custom_call.1} parent=1 // pred_check
      _
    $region31: #{tpu_custom_call.1} parent=1 // pred_check_branch
      %170 = sbr.rel (0) target = $region33
    $region32: #{tpu_custom_call.1} parent=1 // pred_region
      %171 = dma.done [#allocation4], 64
    $region33: #{tpu_custom_call.1} parent=1 // pred_fallthru
      _
    %172 = vsyncpa [#allocation3], 1
    %173 = vsyncpa [#allocation6], 1
    %174 = vsyncpa [#allocation4], 1

</llo_original>
